<compile_context>
chip_gen: v7x
topology: tpu7x:2x2x1
jax: 0.10.0
libtpu: 0.0.40
codegen_flags: <defaults>
</compile_context>

<pallas_src>
import functools
import math

import jax
import jax.numpy as jnp
from jax.experimental import pallas as pl
from jax.experimental.pallas import tpu as pltpu

LN_EPS = 1e-12
NEG_INF = -1e9  # additive mask bias, applied in f32 before exp
VMEM_LIMIT_BYTES = 56 * 1024 * 1024  # sized for v7x's 64 MiB physical VMEM

# Single-buffer the constant-index weight blocks if this JAX exposes
# BlockSpec(pipeline_mode=...); degrade gracefully (just loses the VMEM saving).
try:
    pl.BlockSpec((8, 128), lambda i: (0, 0), pipeline_mode=pl.Buffered(1))
    _PARAM_PIPELINE = {"pipeline_mode": pl.Buffered(1)}
except Exception:  # pragma: no cover - older JAX without Buffered/pipeline_mode
    _PARAM_PIPELINE = {}


# ----------------------------------------------------------------------------
# in-kernel helpers
# ----------------------------------------------------------------------------
def _layernorm(x, gamma, beta, eps=LN_EPS):
    mean = jnp.mean(x, axis=-1, keepdims=True)
    var = jnp.mean((x - mean) ** 2, axis=-1, keepdims=True)
    return (x - mean) * jax.lax.rsqrt(var + eps) * gamma + beta


def _to_heads(x2d, num_heads):
    # [L, H] -> [nh, L, d]  (heads-major for batched MXU matmuls)
    # TODO(synk): pltpu.einshape("l(nd)->nld", ...) is the lane-layout-aware
    # alternative to the reshape+transpose pair.
    L, H = x2d.shape
    return jnp.transpose(x2d.reshape(L, num_heads, H // num_heads), (1, 0, 2))


def _from_heads(x3d):
    # [nh, L, d] -> [L, H]
    nh, L, d = x3d.shape
    return jnp.transpose(x3d, (1, 0, 2)).reshape(L, nh * d)


def _attend(q2d, kh, vh, bias, num_heads):
    """q2d [tq,H] f32; kh/vh [nh,L,d] bf16; bias broadcastable to [nh,tq,L]."""
    tq, H = q2d.shape
    d = H // num_heads
    scale = 1.0 / math.sqrt(d)

    qh = _to_heads(q2d, num_heads).astype(jnp.bfloat16)          # [nh, tq, d]
    scores = jnp.einsum("nqd,nkd->nqk", qh, kh,
                        preferred_element_type=jnp.float32) * scale
    scores = scores + bias                                        # f32 mask math
    m = jnp.max(scores, axis=-1, keepdims=True)
    p = jnp.exp(scores - m)
    denom = jnp.sum(p, axis=-1, keepdims=True)
    probs = p * pl.reciprocal(denom, approx=True)                 # EUP reciprocal
    ctx = jnp.einsum("nqk,nkd->nqd", probs.astype(jnp.bfloat16), vh,
                     preferred_element_type=jnp.float32)          # [nh, tq, d]
    return _from_heads(ctx)                                        # [tq, H] f32


# ----------------------------------------------------------------------------
# kernel 1: embeddings  (inputs_embeds + pos_emb + tok_type_emb -> LayerNorm)
# ----------------------------------------------------------------------------
def embed_kernel(x_ref, pos_ref, tok_ref, gamma_ref, beta_ref, out_ref):
    y = x_ref[...] + pos_ref[...] + tok_ref[...]                  # [T,H] f32
    out_ref[...] = _layernorm(y, gamma_ref[...], beta_ref[...]).astype(out_ref.dtype)


# ----------------------------------------------------------------------------
# kernel 2: one fused encoder layer, tiled over query rows
# grid = (batch, T // tq); K/V hoisted into VMEM scratch at q-tile 0
# ----------------------------------------------------------------------------
def layer_kernel(x_ref, img_ref, tmask_ref, imask_ref,
                 s_wq, s_bq, s_wkv, s_bkv, s_wo, s_bo, s_g, s_b,
                 c_wq, c_bq, c_wkv, c_bkv, c_wo, c_bo, c_g, c_b,
                 f_w1, f_b1, f_w2, f_b2, f_g, f_b,
                 out_ref,
                 ks_ref, vs_ref, kc_ref, vc_ref,
                 *, num_heads, tq):
    T, H = x_ref.shape          # full sequence block (one batch element)
    qi = pl.program_id(1)

    # ---- project K/V (self + cross) once per batch element into scratch ----
    @pl.when(qi == 0)
    def _():
        x_full = x_ref[...]                                              # [T,H] bf16
        kv = jnp.dot(x_full, s_wkv[...],
                     preferred_element_type=jnp.float32) + s_bkv[...]    # [T,2H]
        ks_ref[...] = _to_heads(kv[:, :H], num_heads).astype(jnp.bfloat16)
        vs_ref[...] = _to_heads(kv[:, H:], num_heads).astype(jnp.bfloat16)
        kvc = jnp.dot(img_ref[...], c_wkv[...],
                      preferred_element_type=jnp.float32) + c_bkv[...]   # [S,2H]
        kc_ref[...] = _to_heads(kvc[:, :H], num_heads).astype(jnp.bfloat16)
        vc_ref[...] = _to_heads(kvc[:, H:], num_heads).astype(jnp.bfloat16)

    # ---- current query tile ----
    q0 = pl.multiple_of(qi * tq, tq)
    x_tile_bf = x_ref[pl.ds(q0, tq), :]                                  # [tq,H] bf16
    x_tile = x_tile_bf.astype(jnp.float32)

    # attention biases built in-kernel from the 1-D masks (no O(B*T^2) DMA)
    rows = q0 + jax.lax.broadcasted_iota(jnp.int32, (tq, T), 0)
    cols = jax.lax.broadcasted_iota(jnp.int32, (tq, T), 1)
    key_ok = tmask_ref[...] > 0.5                                        # [1,T]
    self_bias = jnp.where((cols <= rows) & key_ok, 0.0, NEG_INF)         # [tq,T]
    cross_bias = jnp.where(imask_ref[...] > 0.5, 0.0, NEG_INF)           # [1,S]

    # ---- causal+padding masked self-attention + residual + LN ----
    q = jnp.dot(x_tile_bf, s_wq[...],
                preferred_element_type=jnp.float32) + s_bq[...]
    ctx = _attend(q, ks_ref[...], vs_ref[...], self_bias, num_heads)
    attn = jnp.dot(ctx.astype(jnp.bfloat16), s_wo[...],
                   preferred_element_type=jnp.float32) + s_bo[...]
    h1 = _layernorm(attn + x_tile, s_g[...], s_b[...])

    # ---- cross-attention over image tokens + residual + LN ----
    q = jnp.dot(h1.astype(jnp.bfloat16), c_wq[...],
                preferred_element_type=jnp.float32) + c_bq[...]
    ctx = _attend(q, kc_ref[...], vc_ref[...], cross_bias, num_heads)
    attn = jnp.dot(ctx.astype(jnp.bfloat16), c_wo[...],
                   preferred_element_type=jnp.float32) + c_bo[...]
    h2 = _layernorm(attn + h1, c_g[...], c_b[...])

    # ---- GELU FFN + residual + LN ----
    hmid = jnp.dot(h2.astype(jnp.bfloat16), f_w1[...],
                   preferred_element_type=jnp.float32) + f_b1[...]
    hmid = jax.nn.gelu(hmid, approximate=False)        # BERT "gelu" (erf form)
    y = jnp.dot(hmid.astype(jnp.bfloat16), f_w2[...],
                preferred_element_type=jnp.float32) + f_b2[...] + h2
    out_ref[...] = _layernorm(y, f_g[...], f_b[...]).astype(out_ref.dtype)
    # TODO(synk): for T >= 1-2K, switch _attend to an online-softmax (flash)
    # loop over key blocks instead of materializing [nh, tq, T] scores.


# ----------------------------------------------------------------------------
# pallas_call wrappers
# ----------------------------------------------------------------------------
def _pick_tq(T, target=256):
    """Largest 8-aligned divisor of T <= target; falls back to full T."""
    if T <= target:
        return T
    for cand in range(target, 7, -1):
        if T % cand == 0 and cand % 8 == 0:
            return cand
    return T


def _param_spec(arr, ngrid):
    # shared (non-batched) parameter: constant block index, single-buffered
    idx = (0,) * arr.ndim
    if ngrid == 1:
        return pl.BlockSpec(arr.shape, lambda b: idx, **_PARAM_PIPELINE)
    return pl.BlockSpec(arr.shape, lambda b, q: idx, **_PARAM_PIPELINE)


def embed_call(x, pos, tok, gamma, beta):
    B, T, H = x.shape
    return pl.pallas_call(
        embed_kernel,
        out_shape=jax.ShapeDtypeStruct((B, T, H), jnp.bfloat16),
        grid=(B,),
        in_specs=[pl.BlockSpec((None, T, H), lambda b: (b, 0, 0)),
                  _param_spec(pos, 1), _param_spec(tok, 1),
                  _param_spec(gamma, 1), _param_spec(beta, 1)],
        out_specs=pl.BlockSpec((None, T, H), lambda b: (b, 0, 0)),
        compiler_params=pltpu.CompilerParams(
            dimension_semantics=("parallel",),
            vmem_limit_bytes=VMEM_LIMIT_BYTES),
    )(x, pos, tok, gamma, beta)


def layer_call(hidden, image_bf16, tmask, imask, layer, num_heads):
    B, T, H = hidden.shape
    S = image_bf16.shape[1]
    assert H % num_heads == 0
    head_dim = H // num_heads
    tq = _pick_tq(T)

    sp, cp, fp = layer["self"], layer["cross"], layer["ffn"]
    args = (hidden, image_bf16, tmask, imask,
            sp["wq"], sp["bq"], sp["wkv"], sp["bkv"], sp["wo"], sp["bo"],
            sp["gamma"], sp["beta"],
            cp["wq"], cp["bq"], cp["wkv"], cp["bkv"], cp["wo"], cp["bo"],
            cp["gamma"], cp["beta"],
            fp["w1"], fp["b1"], fp["w2"], fp["b2"], fp["gamma"], fp["beta"])

    in_specs = [
        pl.BlockSpec((None, T, H), lambda b, q: (b, 0, 0)),   # full seq (keys)
        pl.BlockSpec((None, S, H), lambda b, q: (b, 0, 0)),   # image tokens
        pl.BlockSpec((None, 1, T), lambda b, q: (b, 0, 0)),   # text mask
        pl.BlockSpec((None, 1, S), lambda b, q: (b, 0, 0)),   # image mask
    ] + [_param_spec(a, 2) for a in args[4:]]

    return pl.pallas_call(
        functools.partial(layer_kernel, num_heads=num_heads, tq=tq),
        out_shape=jax.ShapeDtypeStruct((B, T, H), jnp.bfloat16),
        grid=(B, T // tq),
        in_specs=in_specs,
        out_specs=pl.BlockSpec((None, tq, H), lambda b, q: (b, q, 0)),
        scratch_shapes=[
            pltpu.VMEM((num_heads, T, head_dim), jnp.bfloat16),   # self K
            pltpu.VMEM((num_heads, T, head_dim), jnp.bfloat16),   # self V
            pltpu.VMEM((num_heads, S, head_dim), jnp.bfloat16),   # cross K
            pltpu.VMEM((num_heads, S, head_dim), jnp.bfloat16),   # cross V
        ],
        # batch axis parallel (megacore shard); q-tile axis must be sequential
        # so the pl.when(qi==0) K/V hoist runs before the other tiles.
        compiler_params=pltpu.CompilerParams(
            dimension_semantics=("parallel", "arbitrary"),
            vmem_limit_bytes=VMEM_LIMIT_BYTES),
    )(*args)


# ----------------------------------------------------------------------------
# FusionModel forward
# ----------------------------------------------------------------------------
def fusion_forward(params, text_embed, text_masks, image_embed, image_masks,
                   *, num_heads):
    B, T, H = text_embed.shape
    S = image_embed.shape[1]

    # --- BertEmbeddings (inputs_embeds path) ---
    hidden = embed_call(text_embed, params["pos_emb"][:T], params["tok_emb"],
                        params["emb_gamma"], params["emb_beta"])   # bf16 carry

    # masks stay 1-D per token; the kernels build the additive biases in-VMEM
    image_bf16 = image_embed.astype(jnp.bfloat16)
    tmask = text_masks.astype(jnp.float32).reshape(B, 1, T)
    imask = image_masks.astype(jnp.float32).reshape(B, 1, S)

    # --- BertEncoder layers: self-attn -> cross-attn -> FFN (one fused call) ---
    # TODO(synk): cross-call prefetch of layer i+1 weights (semaphore-valued
    # outputs) would hide weight DMA at small batch; not implemented here.
    for layer in params["layers"]:
        hidden = layer_call(hidden, image_bf16, tmask, imask, layer, num_heads)

    return hidden.astype(jnp.float32)  # last_hidden_state
    # TODO(synk): dropout is identity in eval mode; pretrained-weight loading
    # and the unused pooler are out of scope.


# ----------------------------------------------------------------------------
# deterministic parameter init (BERT-style: N(0, 0.02), LN gamma=1 beta=0)
# matmul weights stored in bf16; biases & LayerNorm params in f32
# ----------------------------------------------------------------------------
def init_params(key, hidden, intermediate, num_layers, max_pos):
    def nrm(k, shape, dtype=jnp.bfloat16):
        return (0.02 * jax.random.normal(k, shape)).astype(dtype)

    keys = iter(jax.random.split(key, 4 + num_layers * 16))

    def attn_params():
        return dict(
            wq=nrm(next(keys), (hidden, hidden)),
            bq=jnp.zeros((1, hidden), jnp.float32),
            wkv=nrm(next(keys), (hidden, 2 * hidden)),            # fused K|V
            bkv=jnp.zeros((1, 2 * hidden), jnp.float32),
            wo=nrm(next(keys), (hidden, hidden)),
            bo=jnp.zeros((1, hidden), jnp.float32),
            gamma=jnp.ones((1, hidden), jnp.float32),
            beta=jnp.zeros((1, hidden), jnp.float32),
        )

    def ffn_params():
        return dict(
            w1=nrm(next(keys), (hidden, intermediate)),
            b1=jnp.zeros((1, intermediate), jnp.float32),
            w2=nrm(next(keys), (intermediate, hidden)),
            b2=jnp.zeros((1, hidden), jnp.float32),
            gamma=jnp.ones((1, hidden), jnp.float32),
            beta=jnp.zeros((1, hidden), jnp.float32),
        )

    return dict(
        pos_emb=nrm(next(keys), (max_pos, hidden), jnp.float32),
        tok_emb=nrm(next(keys), (1, hidden), jnp.float32),  # token_type_id = 0
        emb_gamma=jnp.ones((1, hidden), jnp.float32),
        emb_beta=jnp.zeros((1, hidden), jnp.float32),
        layers=[dict(self=attn_params(), cross=attn_params(), ffn=ffn_params())
                for _ in range(num_layers)],
    )


# ----------------------------------------------------------------------------
if __name__ == "__main__":
    # small smoke-test config consistent with the module's forward
    # (real benchmarking should use H % 128 == 0 and T/S multiples of 128)
    B, T_TXT, S_IMG = 2, 8, 8
    HIDDEN, HEADS, INTER, LAYERS, MAX_POS = 32, 4, 64, 2, 16

    key = jax.random.PRNGKey(0)
    k_txt, k_img, k_par = jax.random.split(key, 3)

    text_embed = jax.random.normal(k_txt, (B, T_TXT, HIDDEN), jnp.float32)
    image_embed = jax.random.normal(k_img, (B, S_IMG, HIDDEN), jnp.float32)
    text_masks = jnp.array([[1.0] * T_TXT, [1.0] * 6 + [0.0] * 2], jnp.float32)
    image_masks = jnp.array([[1.0] * S_IMG, [1.0] * 5 + [0.0] * 3], jnp.float32)

    params = init_params(k_par, HIDDEN, INTER, LAYERS, MAX_POS)

    out = fusion_forward(params, text_embed, text_masks, image_embed, image_masks,
                         num_heads=HEADS)
    out = jax.block_until_ready(out)

    assert out.shape == (B, T_TXT, HIDDEN)
    assert bool(jnp.all(jnp.isfinite(out)))
    print("KERNEL_OK")
</pallas_src>

<mosaic_0001>
module attributes {stable_mosaic.version = 11 : i64} {
  func.func @embed_kernel(%arg0: i32, %arg1: memref<1x8x32xf32, #tpu.memory_space<vmem>>, %arg2: memref<8x32xf32, #tpu.memory_space<vmem>>, %arg3: memref<1x32xf32, #tpu.memory_space<vmem>>, %arg4: memref<1x32xf32, #tpu.memory_space<vmem>>, %arg5: memref<1x32xf32, #tpu.memory_space<vmem>>, %arg6: memref<1x8x32xbf16, #tpu.memory_space<vmem>>) attributes {dimension_semantics = [#tpu.dimension_semantics<parallel>], iteration_bounds = array<i64: 2>, scalar_prefetch = 0 : i64, scratch_operands = 0 : i64, tpu.core_type = #tpu.core_type<tc>, window_params = [{transform_indices = @transform_0, window_bounds = array<i64: 1, 8, 32>}, {pipeline_mode = #tpu.pipeline_mode<synchronous>, transform_indices = @transform_1, window_bounds = array<i64: 8, 32>}, {pipeline_mode = #tpu.pipeline_mode<synchronous>, transform_indices = @transform_2, window_bounds = array<i64: 1, 32>}, {pipeline_mode = #tpu.pipeline_mode<synchronous>, transform_indices = @transform_3, window_bounds = array<i64: 1, 32>}, {pipeline_mode = #tpu.pipeline_mode<synchronous>, transform_indices = @transform_4, window_bounds = array<i64: 1, 32>}, {transform_indices = @transform_5, window_bounds = array<i64: 1, 8, 32>}]} {
    %c0 = arith.constant 0 : index
    %c0_0 = arith.constant 0 : index
    %c0_1 = arith.constant 0 : index
    %0 = vector.load %arg1[%c0, %c0_0, %c0_1] : memref<1x8x32xf32, #tpu.memory_space<vmem>>, vector<1x8x32xf32>
    %1 = vector.shape_cast %0 : vector<1x8x32xf32> to vector<8x32xf32>
    %c0_2 = arith.constant 0 : index
    %c0_3 = arith.constant 0 : index
    %2 = vector.load %arg2[%c0_2, %c0_3] : memref<8x32xf32, #tpu.memory_space<vmem>>, vector<8x32xf32>
    %3 = arith.addf %1, %2 : vector<8x32xf32>
    %c0_4 = arith.constant 0 : index
    %c0_5 = arith.constant 0 : index
    %4 = vector.load %arg3[%c0_4, %c0_5] : memref<1x32xf32, #tpu.memory_space<vmem>>, vector<1x32xf32>
    %5 = vector.broadcast %4 : vector<1x32xf32> to vector<8x32xf32>
    %6 = arith.addf %3, %5 : vector<8x32xf32>
    %c0_6 = arith.constant 0 : index
    %c0_7 = arith.constant 0 : index
    %7 = vector.load %arg4[%c0_6, %c0_7] : memref<1x32xf32, #tpu.memory_space<vmem>>, vector<1x32xf32>
    %c0_8 = arith.constant 0 : index
    %c0_9 = arith.constant 0 : index
    %8 = vector.load %arg5[%c0_8, %c0_9] : memref<1x32xf32, #tpu.memory_space<vmem>>, vector<1x32xf32>
    %cst = arith.constant dense<0.000000e+00> : vector<8xf32>
    %9 = vector.multi_reduction <add>, %6, %cst [1] : vector<8x32xf32> to vector<8xf32>
    %10 = vector.shape_cast %9 : vector<8xf32> to vector<8x1xf32>
    %cst_10 = arith.constant 3.200000e+01 : f32
    %11 = vector.broadcast %cst_10 : f32 to vector<8x1xf32>
    %12 = arith.divf %10, %11 : vector<8x1xf32>
    %13 = vector.broadcast %12 : vector<8x1xf32> to vector<8x32xf32>
    %14 = arith.subf %6, %13 : vector<8x32xf32>
    %15 = arith.mulf %14, %14 : vector<8x32xf32>
    %cst_11 = arith.constant dense<0.000000e+00> : vector<8xf32>
    %16 = vector.multi_reduction <add>, %15, %cst_11 [1] : vector<8x32xf32> to vector<8xf32>
    %17 = vector.shape_cast %16 : vector<8xf32> to vector<8x1xf32>
    %cst_12 = arith.constant 3.200000e+01 : f32
    %18 = vector.broadcast %cst_12 : f32 to vector<8x1xf32>
    %19 = arith.divf %17, %18 : vector<8x1xf32>
    %20 = vector.broadcast %12 : vector<8x1xf32> to vector<8x32xf32>
    %21 = arith.subf %6, %20 : vector<8x32xf32>
    %cst_13 = arith.constant 9.99999996E-13 : f32
    %22 = vector.broadcast %cst_13 : f32 to vector<8x1xf32>
    %23 = arith.addf %19, %22 : vector<8x1xf32>
    %24 = math.rsqrt %23 : vector<8x1xf32>
    %25 = vector.broadcast %24 : vector<8x1xf32> to vector<8x32xf32>
    %26 = arith.mulf %21, %25 : vector<8x32xf32>
    %27 = vector.broadcast %7 : vector<1x32xf32> to vector<8x32xf32>
    %28 = arith.mulf %26, %27 : vector<8x32xf32>
    %29 = vector.broadcast %8 : vector<1x32xf32> to vector<8x32xf32>
    %30 = arith.addf %28, %29 : vector<8x32xf32>
    %31 = arith.truncf %30 : vector<8x32xf32> to vector<8x32xbf16>
    %c0_14 = arith.constant 0 : index
    %c0_15 = arith.constant 0 : index
    %c0_16 = arith.constant 0 : index
    %32 = vector.load %arg6[%c0_14, %c0_15, %c0_16] : memref<1x8x32xbf16, #tpu.memory_space<vmem>>, vector<1x8x32xbf16>
    %33 = vector.shape_cast %32 : vector<1x8x32xbf16> to vector<8x32xbf16>
    %34 = vector.shape_cast %31 : vector<8x32xbf16> to vector<1x8x32xbf16>
    tpu.vector_store %arg6[%c0_14, %c0_15, %c0_16], %34 {strides = array<i32>} : memref<1x8x32xbf16, #tpu.memory_space<vmem>>, vector<1x8x32xbf16>,
    return
  }
  func.func @transform_0(%arg0: i32) -> (i32, i32, i32) {
    %c0_i32 = arith.constant 0 : i32
    %c0_i32_0 = arith.constant 0 : i32
    %c0_i32_1 = arith.constant 0 : i32
    return %arg0, %c0_i32, %c0_i32_0 : i32, i32, i32
  }
  func.func @transform_1(%arg0: i32) -> (i32, i32) {
    %c0_i32 = arith.constant 0 : i32
    %c0_i32_0 = arith.constant 0 : i32
    %c0_i32_1 = arith.constant 0 : i32
    return %c0_i32, %c0_i32_0 : i32, i32
  }
  func.func @transform_2(%arg0: i32) -> (i32, i32) {
    %c0_i32 = arith.constant 0 : i32
    %c0_i32_0 = arith.constant 0 : i32
    %c0_i32_1 = arith.constant 0 : i32
    return %c0_i32, %c0_i32_0 : i32, i32
  }
  func.func @transform_3(%arg0: i32) -> (i32, i32) {
    %c0_i32 = arith.constant 0 : i32
    %c0_i32_0 = arith.constant 0 : i32
    %c0_i32_1 = arith.constant 0 : i32
    return %c0_i32, %c0_i32_0 : i32, i32
  }
  func.func @transform_4(%arg0: i32) -> (i32, i32) {
    %c0_i32 = arith.constant 0 : i32
    %c0_i32_0 = arith.constant 0 : i32
    %c0_i32_1 = arith.constant 0 : i32
    return %c0_i32, %c0_i32_0 : i32, i32
  }
  func.func @transform_5(%arg0: i32) -> (i32, i32, i32) {
    %c0_i32 = arith.constant 0 : i32
    %c0_i32_0 = arith.constant 0 : i32
    %c0_i32_1 = arith.constant 0 : i32
    return %arg0, %c0_i32, %c0_i32_0 : i32, i32, i32
  }
}

</mosaic_0001>

<llo_original>
// kernel: tpu_custom_call.1
$region0: #{tpu_custom_call.1}
  #allocation0 [shape = 'u32[]', space=smem, size = 0x4, offset = 0x4, fixed_abs, tag = 'smem constant byte address 0x4 - core index']
  #allocation1 [shape = 'u32[144,128]{1,0:T(1,128)}', space=vmem, size = 0x12000, scoped, tag = 'internal scratch']
  %s0 = inlined_call_operand.hbm [shape: f32[2,8,32], index: 0, kind: input, shape index: {}]
  %s1 = inlined_call_operand.hbm [shape: f32[8,32], index: 1, kind: input, shape index: {}]
  %s2 = inlined_call_operand.vmem [shape: f32[1,32], index: 2, kind: input, shape index: {}]
  %s3 = inlined_call_operand.vmem [shape: f32[1,32], index: 3, kind: input, shape index: {}]
  %s4 = inlined_call_operand.vmem [shape: f32[1,32], index: 4, kind: input, shape index: {}]
  %s5 = inlined_call_operand.hbm [shape: bf16[2,8,32], index: 5, kind: output, shape index: {}]
  %s6 = sld [smem:[#allocation0]]
  $region61: #{tpu_custom_call.1} parent=0
    _
  %s8 = ssub.s32 1, %s6
  %s9 = scalar_select 0, %s8, %s6
  $region1: #{tpu_custom_call.1} parent=0
    #allocation2 [shape = 'u8[8192]{0}', space=vmem, size = 0x2000, scoped, tag = 'input window, operand 0']
    #allocation3 [shape = 's32[2]{0}', space=sflag, size = 0x8, scoped, tag = 'scoped memory for tpu_custom_call.1']
    #allocation4 [shape = 's32[2]{0}', space=sflag, size = 0x8, scoped, tag = 'scoped memory for tpu_custom_call.1']
    #allocation5 [shape = 'u8[4096]{0}', space=vmem, size = 0x1000, scoped, tag = 'input window, operand 1, single buffered']
    #allocation6 [shape = 's32[1]{0}', space=sflag, size = 0x4, scoped, tag = 'scoped memory for tpu_custom_call.1']
    #allocation7 [shape = 'u8[4096]{0}', space=vmem, size = 0x1000, scoped, tag = 'output window, operand 0']
    %10 = vsyncpa [#allocation3], 0
    %s11 = scalar_lea.sflag [#allocation3], 1
    %12 = vsyncpa %s11, 0
    %13 = vsyncpa [#allocation6], 0
    %14 = vsyncpa [#allocation4], 0
    %s15 = scalar_lea.sflag [#allocation4], 1
    %16 = vsyncpa %s15, 0
    loop: start=0, step=1, limit=4
    $region2: #{tpu_custom_call.1} parent=1 // loop_pre_header
      _
    $region3: #{tpu_custom_call.1} parent=1 // loop_header
      %s18 = sphi 0, %s22
      %p19 = scmp.ge.s32.totalorder %s18, 4
      %s28 = sphi 0, %s30
      %s31 = sphi 0, %s28
      %s32 = sphi 0, %s31
      %s48 = sphi 0, %s32
      %s52 = sphi 0, %s52
      %s54 = sphi 0, %s52
      %s55 = sphi 0, %s54
      %s69 = sphi 0, %s55
      %s73 = sphi 0, %s73
      %s75 = sphi 0, %s73
      %s76 = sphi 0, %s75
      %s90 = sphi 0, %s76
      %s94 = sphi 0, %s94
      %s96 = sphi 0, %s94
      %s97 = sphi 0, %s96
      %s111 = sphi 0, %s97
      %s115 = sphi 0, %s115
      %s117 = sphi 0, %s115
      %s118 = sphi 0, %s117
      %s132 = sphi 0, %s118
      %s138 = sphi 0, %s140
      %s141 = sphi 0, %s138
      %s142 = sphi 0, %s141
      %s158 = sphi 0, %s142
    $region4: #{tpu_custom_call.1} parent=1 // loop_header_branch
      %21 = sbr.rel (%p19) target = $region8
    $region5: #{tpu_custom_call.1} parent=1 // loop_body
      %s23 = ssub.s32 %s18, 1
      %s24 = ssub.s32 %s18, 2
      %s25 = sadd.s32 %s18, 1
      %s26 = ssub.s32 %s18, %s25
      %p27 = scmp.eq.s32.totalorder %s26, 0
      %s29 = sadd.s32 %s28, 1
      %s30 = scalar_select %p27, %s28, %s29
      %p33 = pneg %p27
      %p34 = scmp.eq.s32.totalorder %s18, 1
      %p35 = por %p33, %p34
      %p36 = scmp.ne.s32.totalorder %s28, %s31
      %p37 = scmp.eq.s32.totalorder %s18, 0
      %p38 = por %p36, %p37
      %p39 = scmp.ne.s32.totalorder %s28, %s31
      %p40 = scmp.eq.s32.totalorder %s23, 1
      %p41 = por %p39, %p40
      %p42 = scmp.ne.s32.totalorder %s31, %s32
      %p43 = scmp.eq.s32.totalorder %s23, 0
      %p44 = por %p42, %p43
      %p45 = scmp.ne.s32.totalorder %s31, %s32
      %p46 = scmp.eq.s32.totalorder %s24, 1
      %p47 = por %p45, %p46
      %p49 = scmp.ne.s32.totalorder %s32, %s48
      %p50 = scmp.eq.s32.totalorder %s24, 0
      %p51 = por %p49, %p50
      %s53 = sadd.s32 %s52, 1
      %p56 = scmp.eq.s32.totalorder %s18, 1
      %p57 = scmp.ne.s32.totalorder %s52, %s54
      %p58 = scmp.eq.s32.totalorder %s18, 0
      %p59 = por %p57, %p58
      %p60 = scmp.ne.s32.totalorder %s52, %s54
      %p61 = scmp.eq.s32.totalorder %s23, 1
      %p62 = por %p60, %p61
      %p63 = scmp.ne.s32.totalorder %s54, %s55
      %p64 = scmp.eq.s32.totalorder %s23, 0
      %p65 = por %p63, %p64
      %p66 = scmp.ne.s32.totalorder %s54, %s55
      %p67 = scmp.eq.s32.totalorder %s24, 1
      %p68 = por %p66, %p67
      %p70 = scmp.ne.s32.totalorder %s55, %s69
      %p71 = scmp.eq.s32.totalorder %s24, 0
      %p72 = por %p70, %p71
      %s74 = sadd.s32 %s73, 1
      %p77 = scmp.eq.s32.totalorder %s18, 1
      %p78 = scmp.ne.s32.totalorder %s73, %s75
      %p79 = scmp.eq.s32.totalorder %s18, 0
      %p80 = por %p78, %p79
      %p81 = scmp.ne.s32.totalorder %s73, %s75
      %p82 = scmp.eq.s32.totalorder %s23, 1
      %p83 = por %p81, %p82
      %p84 = scmp.ne.s32.totalorder %s75, %s76
      %p85 = scmp.eq.s32.totalorder %s23, 0
      %p86 = por %p84, %p85
      %p87 = scmp.ne.s32.totalorder %s75, %s76
      %p88 = scmp.eq.s32.totalorder %s24, 1
      %p89 = por %p87, %p88
      %p91 = scmp.ne.s32.totalorder %s76, %s90
      %p92 = scmp.eq.s32.totalorder %s24, 0
      %p93 = por %p91, %p92
      %s95 = sadd.s32 %s94, 1
      %p98 = scmp.eq.s32.totalorder %s18, 1
      %p99 = scmp.ne.s32.totalorder %s94, %s96
      %p100 = scmp.eq.s32.totalorder %s18, 0
      %p101 = por %p99, %p100
      %p102 = scmp.ne.s32.totalorder %s94, %s96
      %p103 = scmp.eq.s32.totalorder %s23, 1
      %p104 = por %p102, %p103
      %p105 = scmp.ne.s32.totalorder %s96, %s97
      %p106 = scmp.eq.s32.totalorder %s23, 0
      %p107 = por %p105, %p106
      %p108 = scmp.ne.s32.totalorder %s96, %s97
      %p109 = scmp.eq.s32.totalorder %s24, 1
      %p110 = por %p108, %p109
      %p112 = scmp.ne.s32.totalorder %s97, %s111
      %p113 = scmp.eq.s32.totalorder %s24, 0
      %p114 = por %p112, %p113
      %s116 = sadd.s32 %s115, 1
      %p119 = scmp.eq.s32.totalorder %s18, 1
      %p120 = scmp.ne.s32.totalorder %s115, %s117
      %p121 = scmp.eq.s32.totalorder %s18, 0
      %p122 = por %p120, %p121
      %p123 = scmp.ne.s32.totalorder %s115, %s117
      %p124 = scmp.eq.s32.totalorder %s23, 1
      %p125 = por %p123, %p124
      %p126 = scmp.ne.s32.totalorder %s117, %s118
      %p127 = scmp.eq.s32.totalorder %s23, 0
      %p128 = por %p126, %p127
      %p129 = scmp.ne.s32.totalorder %s117, %s118
      %p130 = scmp.eq.s32.totalorder %s24, 1
      %p131 = por %p129, %p130
      %p133 = scmp.ne.s32.totalorder %s118, %s132
      %p134 = scmp.eq.s32.totalorder %s24, 0
      %p135 = por %p133, %p134
      %s136 = ssub.s32 %s18, %s25
      %p137 = scmp.eq.s32.totalorder %s136, 0
      %s139 = sadd.s32 %s138, 1
      %s140 = scalar_select %p137, %s138, %s139
      %p143 = pneg %p137
      %p144 = scmp.eq.s32.totalorder %s18, 1
      %p145 = por %p143, %p144
      %p146 = scmp.ne.s32.totalorder %s138, %s141
      %p147 = scmp.eq.s32.totalorder %s18, 0
      %p148 = por %p146, %p147
      %p149 = scmp.ne.s32.totalorder %s138, %s141
      %p150 = scmp.eq.s32.totalorder %s23, 1
      %p151 = por %p149, %p150
      %p152 = scmp.ne.s32.totalorder %s141, %s142
      %p153 = scmp.eq.s32.totalorder %s23, 0
      %p154 = por %p152, %p153
      %p155 = scmp.ne.s32.totalorder %s141, %s142
      %p156 = scmp.eq.s32.totalorder %s24, 1
      %p157 = por %p155, %p156
      %p159 = scmp.ne.s32.totalorder %s142, %s158
      %p160 = scmp.eq.s32.totalorder %s24, 0
      %p161 = por %p159, %p160
      %p162 = scmp.le.s32.totalorder 1, %s18
      %p163 = scmp.lt.s32.totalorder %s18, 3
      %p164 = pnand %p162, %p163
      %p165 = pneg %p164
      // Predicated region
      $region9: #{tpu_custom_call.1} parent=5 // pred_check
        _
      $region10: #{tpu_custom_call.1} parent=5 // pred_check_branch
        %167 = sbr.rel (%p164) target = $region12
      $region11: #{tpu_custom_call.1} parent=5 // pred_region
        %s168 = ssub.s32 %s18, 1
        // Predicated region
        $region13: #{tpu_custom_call.1} parent=11 // pred_check
          %p169 = pneg %p65
        $region14: #{tpu_custom_call.1} parent=11 // pred_check_branch
          %171 = sbr.rel (%p169) target = $region16
        $region15: #{tpu_custom_call.1} parent=11 // pred_region
          %s173 = ssub.s32 128, 128
          %174 = vsyncadd [#allocation6], %s173
          %s176 = sshll.u32 [#allocation5], 4
          %s177 = int_to_ptr.vmem [resolvable:$true] %s176
          %179 = dma.hbm_to_vmem [thread:$0]  %s1, 128, %s177, [#allocation6]
        $region16: #{tpu_custom_call.1} parent=11 // pred_fallthru
          _
        // Predicated region
        $region17: #{tpu_custom_call.1} parent=11 // pred_check
          %p180 = pneg %p86
        $region18: #{tpu_custom_call.1} parent=11 // pred_check_branch
          %182 = sbr.rel (%p180) target = $region20
        $region19: #{tpu_custom_call.1} parent=11 // pred_region
          _
        $region20: #{tpu_custom_call.1} parent=11 // pred_fallthru
          _
        // Predicated region
        $region21: #{tpu_custom_call.1} parent=11 // pred_check
          %p183 = pneg %p107
        $region22: #{tpu_custom_call.1} parent=11 // pred_check_branch
          %185 = sbr.rel (%p183) target = $region24
        $region23: #{tpu_custom_call.1} parent=11 // pred_region
          _
        $region24: #{tpu_custom_call.1} parent=11 // pred_fallthru
          _
        // Predicated region
        $region25: #{tpu_custom_call.1} parent=11 // pred_check
          %p186 = pneg %p128
        $region26: #{tpu_custom_call.1} parent=11 // pred_check_branch
          %188 = sbr.rel (%p186) target = $region28
        $region27: #{tpu_custom_call.1} parent=11 // pred_region
          _
        $region28: #{tpu_custom_call.1} parent=11 // pred_fallthru
          _
      $region12: #{tpu_custom_call.1} parent=5 // pred_fallthru
        _
      %p189 = scmp.lt.s32.totalorder %s18, 2
      // Predicated region
      $region29: #{tpu_custom_call.1} parent=5 // pred_check
        %p190 = pneg %p189
      $region30: #{tpu_custom_call.1} parent=5 // pred_check_branch
        %192 = sbr.rel (%p190) target = $region32
      $region31: #{tpu_custom_call.1} parent=5 // pred_region
        // Predicated region
        $region33: #{tpu_custom_call.1} parent=31 // pred_check
          %p193 = pneg %p38
        $region34: #{tpu_custom_call.1} parent=31 // pred_check_branch
          %195 = sbr.rel (%p193) target = $region36
        $region35: #{tpu_custom_call.1} parent=31 // pred_region
          %s196 = sand.u32 %s28, 1
          %s197 = scalar_lea.sflag [#allocation3], %s196
          %s198 = sand.u32 %s28, 1
          %s199 = smul.addr %s198, 8
          %s200 = scalar_lea.vmem [#allocation2], %s199
          %s202 = ssub.s32 128, 128
          %203 = vsyncadd %s197, %s202
          %s204 = smul.addr %s18, 128
          %s205 = scalar_lea.hbm %s0, %s204
          %s207 = sshll.u32 %s200, 4
          %s208 = int_to_ptr.vmem [resolvable:$true] %s207
          %210 = dma.hbm_to_vmem [thread:$0]  %s205, 128, %s208, %s197
        $region36: #{tpu_custom_call.1} parent=31 // pred_fallthru
          _
      $region32: #{tpu_custom_call.1} parent=5 // pred_fallthru
        _
      %p211 = scmp.le.s32.totalorder 1, %s18
      %p212 = scmp.lt.s32.totalorder %s18, 3
      %p213 = pnand %p211, %p212
      %p214 = pneg %p213
      // Predicated region
      $region37: #{tpu_custom_call.1} parent=5 // pred_check
        _
      $region38: #{tpu_custom_call.1} parent=5 // pred_check_branch
        %216 = sbr.rel (%p213) target = $region40
      $region39: #{tpu_custom_call.1} parent=5 // pred_region
        %s217 = ssub.s32 %s18, 1
        %s218 = sand.u32 %s31, 1
        %s219 = scalar_lea.sflag [#allocation3], %s218
        %s220 = sand.u32 %s31, 1
        %s221 = smul.addr %s220, 8
        %s222 = scalar_lea.vmem [#allocation2], %s221
        // Predicated region
        $region41: #{tpu_custom_call.1} parent=39 // pred_check
          %p223 = pneg %p44
        $region42: #{tpu_custom_call.1} parent=39 // pred_check_branch
          %225 = sbr.rel (%p223) target = $region44
        $region43: #{tpu_custom_call.1} parent=39 // pred_region
          %226 = dma.done %s219, 128
        $region44: #{tpu_custom_call.1} parent=39 // pred_fallthru
          _
        // Predicated region
        $region45: #{tpu_custom_call.1} parent=39 // pred_check
          %p227 = pneg %p65
        $region46: #{tpu_custom_call.1} parent=39 // pred_check_branch
          %229 = sbr.rel (%p227) target = $region48
        $region47: #{tpu_custom_call.1} parent=39 // pred_region
          %230 = dma.done [#allocation6], 128
        $region48: #{tpu_custom_call.1} parent=39 // pred_fallthru
          _
        %s231 = sand.u32 %s31, 1
        %s232 = scalar_lea.sflag [#allocation3], %s231
        %s233 = sand.u32 %s31, 1
        %s234 = smul.addr %s233, 8
        %s235 = scalar_lea.vmem [#allocation2], %s234
        %p236 = pneg %p44
        %p237 = pneg %p41
        %p238 = pneg %p65
        %p239 = pneg %p62
        %p240 = pneg %p86
        %p241 = pneg %p83
        %p242 = pneg %p107
        %p243 = pneg %p104
        %p244 = pneg %p128
        %p245 = pneg %p125
        %p246 = pneg %p154
        %p247 = pneg %p151
        %s248 = sand.u32 %s141, 1
        %s249 = scalar_lea.sflag [#allocation4], %s248
        %s250 = sand.u32 %s141, 1
        %s251 = smul.addr %s250, 4
        %s252 = scalar_lea.vmem [#allocation7], %s251
        %v253 = vld [vmem:[%s222] sm:$0xff]
        %v254 = vld [vmem:[#allocation5] sm:$0xff]
        %v255 = vadd.f32 %v253, %v254
        %v256 = vld [vmem:[%s2] sm:$0x1]
        %v258 = vlaneseq
        %v259 = vshrl.u32 %v258, 7
        %v260 = vsub.s32 0, %v259
        %v261 = vrot.slane %v256, %v260
        %v263 = vadd.f32 %v255, %v261
        %v264 = vld [vmem:[%s3] sm:$0x1]
        %v265 = vld [vmem:[%s4] sm:$0x1]
        %vm266 = vcmask 261120
        %v267 = vsel %vm266, %v263, 0.0
        %268 = vadd.xlane.f32.xlu0 %v267
        %v269 = vpop.xlane.xlu0 %268
        %v270 = vrcp.pop 32.0
        %v271 = vmul.f32 %v269, %v270
        %v272 = vsub.f32 %v263, %v271
        %v273 = vmul.f32 %v272, %v272
        %v274 = vsel %vm266, %v273, 0.0
        %275 = vadd.xlane.f32.xlu0 %v274
        %v276 = vpop.xlane.xlu0 %275
        %v277 = vmul.f32 %v276, %v270
        %v278 = vadd.f32 %v277, 1e-12
        %v279 = vrsqrt.pop %v278
        %v280 = vmul.f32 %v272, %v279
        %v282 = vlaneseq
        %v283 = vshrl.u32 %v282, 7
        %v284 = vsub.s32 0, %v283
        %v285 = vrot.slane %v264, %v284
        %v287 = vmul.f32 %v280, %v285
        %v289 = vlaneseq
        %v290 = vshrl.u32 %v289, 7
        %v291 = vsub.s32 0, %v290
        %v292 = vrot.slane %v265, %v291
        %v294 = vadd.f32 %v287, %v292
        %v295 = vpack.c.bf16 %v294, %v294
        %vm296 = vcmask 257024
        %297 = vst.msk [vmem:[%s252] sm:$0xf] %vm296, %v295
        %s298 = sand.u32 %s141, 1
        %s299 = scalar_lea.sflag [#allocation4], %s298
        %s300 = sand.u32 %s141, 1
        %s301 = smul.addr %s300, 4
        %s302 = scalar_lea.vmem [#allocation7], %s301
        // Predicated region
        $region49: #{tpu_custom_call.1} parent=39 // pred_check
          %p303 = pneg %p151
        $region50: #{tpu_custom_call.1} parent=39 // pred_check_branch
          %305 = sbr.rel (%p303) target = $region52
        $region51: #{tpu_custom_call.1} parent=39 // pred_region
          %s307 = ssub.s32 64, 64
          %308 = vsyncadd %s299, %s307
          %s309 = smul.addr %s23, 64
          %s310 = scalar_lea.hbm %s5, %s309
          %s312 = sshll.u32 %s302, 4
          %s313 = int_to_ptr.vmem [resolvable:$true] %s312
          %315 = dma.vmem_to_hbm [thread:$0]  %s313, 64, %s310, %s299
        $region52: #{tpu_custom_call.1} parent=39 // pred_fallthru
          _
      $region40: #{tpu_custom_call.1} parent=5 // pred_fallthru
        _
      %p316 = scmp.le.s32.totalorder 2, %s18
      // Predicated region
      $region53: #{tpu_custom_call.1} parent=5 // pred_check
        %p317 = pneg %p316
      $region54: #{tpu_custom_call.1} parent=5 // pred_check_branch
        %319 = sbr.rel (%p317) target = $region56
      $region55: #{tpu_custom_call.1} parent=5 // pred_region
        %s320 = ssub.s32 %s18, 2
        // Predicated region
        $region57: #{tpu_custom_call.1} parent=55 // pred_check
          %p321 = pneg %p157
        $region58: #{tpu_custom_call.1} parent=55 // pred_check_branch
          %323 = sbr.rel (%p321) target = $region60
        $region59: #{tpu_custom_call.1} parent=55 // pred_region
          %s324 = sand.u32 %s142, 1
          %s325 = scalar_lea.sflag [#allocation4], %s324
          %s326 = sand.u32 %s142, 1
          %s327 = smul.addr %s326, 4
          %s328 = scalar_lea.vmem [#allocation7], %s327
          %329 = dma.done %s325, 64
        $region60: #{tpu_custom_call.1} parent=55 // pred_fallthru
          _
      $region56: #{tpu_custom_call.1} parent=5 // pred_fallthru
        _
    $region6: #{tpu_custom_call.1} parent=1 // loop_footer
      %s22 = sadd.s32 1, %s18
    $region7: #{tpu_custom_call.1} parent=1 // loop_footer_branch
      %17 = sbr.rel target = $region3
    $region8: #{tpu_custom_call.1} parent=1 // loop_exit
      _
    %330 = vsyncpa [#allocation3], 1
    %s331 = scalar_lea.sflag [#allocation3], 1
    %332 = vsyncpa %s331, 1
    %333 = vsyncpa [#allocation6], 1
    %334 = vsyncpa [#allocation4], 1
    %s335 = scalar_lea.sflag [#allocation4], 1
    %336 = vsyncpa %s335, 1

</llo_original>
